<compile_context>
chip_gen: v6e
topology: v6e:2x2x1
jax: 0.10.0
libtpu: 0.0.40
codegen_flags: <defaults>
</compile_context>

<pallas_src>
import functools

import jax
import jax.numpy as jnp
from jax.experimental import pallas as pl
from jax.experimental.pallas import tpu as pltpu


# ----------------------------------------------------------------------------- kernel
def _mlp_kernel(n_hidden, x_ref, *refs):
    """Fused MLP forward for one batch tile.

    refs layout (BN already folded on the host):
      for each hidden layer i: w_i (bf16, [in,out]), b_i (f32, [1,out])
      then: w_out (bf16, [in,out_pad]), b_out (f32, [1,out_pad])
      last: o_ref (f32, [TB, out_pad])
    """
    o_ref = refs[-1]
    h = x_ref[...].astype(jnp.float32)
    idx = 0
    for _ in range(n_hidden):                      # statically unrolled layer loop
        w = refs[idx][...]
        b = refs[idx + 1][...]
        idx += 2
        z = jnp.dot(h.astype(w.dtype), w, preferred_element_type=jnp.float32) + b
        h = jnp.maximum(z, 0.0)                    # Linear+BN folded, then ReLU
        # Dropout: identity in eval mode.
    w_out = refs[idx][...]
    b_out = refs[idx + 1][...]
    o_ref[...] = (
        jnp.dot(h.astype(w_out.dtype), w_out, preferred_element_type=jnp.float32) + b_out
    ).astype(o_ref.dtype)


# ------------------------------------------------------------------------ host params
def init_params(key, input_size, hidden_sizes, output_size):
    """Deterministic params with the PyTorch module's shapes (eval mode), f32."""
    layers = []
    prev = input_size
    for hsz in hidden_sizes:
        key, kw, kb, kg, kbe, km, kv = jax.random.split(key, 7)
        bound = 1.0 / float(prev) ** 0.5
        layers.append(
            dict(
                w=jax.random.uniform(kw, (prev, hsz), jnp.float32, -bound, bound),
                b=jax.random.uniform(kb, (hsz,), jnp.float32, -bound, bound),
                gamma=jax.random.uniform(kg, (hsz,), jnp.float32, 0.5, 1.5),
                beta=jax.random.uniform(kbe, (hsz,), jnp.float32, -0.1, 0.1),
                mean=jax.random.uniform(km, (hsz,), jnp.float32, -0.1, 0.1),
                var=jax.random.uniform(kv, (hsz,), jnp.float32, 0.5, 1.5),
            )
        )
        prev = hsz
    key, kw, kb = jax.random.split(key, 3)
    bound = 1.0 / float(prev) ** 0.5
    w_out = jax.random.uniform(kw, (prev, output_size), jnp.float32, -bound, bound)
    b_out = jax.random.uniform(kb, (output_size,), jnp.float32, -bound, bound)
    return layers, (w_out, b_out)


def fold_params(layers, out_wb, *, eps=1e-5, compute_dtype=jnp.bfloat16, lane=128):
    """Fold eval-mode BatchNorm into the neighbouring Linear layers (host side).

    relu(z)*s + t == relu(z*s) + t  (requires s > 0); the additive shift t is pushed
    into the *next* layer's bias:  (g + t) @ W + b == g @ W + (t @ W + b).
    Also pads the output feature dim up to a multiple of 128 for lane-dense stores.
    """
    folded = []
    carry_shift = None
    for L in layers:
        s = L["gamma"] / jnp.sqrt(L["var"] + eps)
        t = L["beta"] - L["mean"] * s
        if not bool(jnp.all(s > 0)):
            # TODO(synk): fall back to explicit in-kernel scale/shift when gamma <= 0
            # (the ReLU-commute fold is only valid for positive scales).
            raise ValueError("BN scale must be positive to fold through ReLU")
        w, b = L["w"], L["b"]
        if carry_shift is not None:
            b = b + carry_shift @ w
        w_f = (w * s[None, :]).astype(compute_dtype)
        b_f = (b * s).reshape(1, -1).astype(jnp.float32)
        folded.append((w_f, b_f))
        carry_shift = t

    w_out, b_out = out_wb
    if carry_shift is not None:
        b_out = b_out + carry_shift @ w_out
    n_out = w_out.shape[1]
    n_pad = -(-n_out // lane) * lane                      # round up to 128 lanes
    w_out_p = jnp.zeros((w_out.shape[0], n_pad), jnp.float32).at[:, :n_out].set(w_out)
    b_out_p = jnp.zeros((n_pad,), jnp.float32).at[:n_out].set(b_out)
    folded.append((w_out_p.astype(compute_dtype), b_out_p.reshape(1, -1)))

    params = [p for pair in folded for p in pair]
    return params, n_pad


# --------------------------------------------------------------------------- wrapper
def _pick_batch_tile(B, requested):
    if requested is not None:
        return requested
    if B <= 1024:
        return B                # single tile (block == full batch is always legal)
    return 512                  # 512-row f32 tiles: ~85% of HBM roofline, (8,128)-aligned


def dust_feedback_forward(x, params, n_hidden, output_size, padded_out, *, block_batch=None):
    """Calls the fused Pallas kernel, tiled over the batch dimension."""
    B, f_in = x.shape
    TB = _pick_batch_tile(B, block_batch)
    grid = (pl.cdiv(B, TB),)

    x_spec = pl.BlockSpec((TB, f_in), lambda i: (i, 0))
    # Full-array parameter blocks with constant index_map -> DMA'd once, VMEM-resident
    # across all batch tiles.
    param_specs = [pl.BlockSpec(p.shape, lambda i: (0, 0)) for p in params]
    out_spec = pl.BlockSpec((TB, padded_out), lambda i: (i, 0))

    weights = [params[2 * l] for l in range(n_hidden + 1)]
    flops = 2 * B * sum(int(w.shape[0]) * int(w.shape[1]) for w in weights)
    param_bytes = sum(int(p.size) * p.dtype.itemsize for p in params)
    bytes_accessed = int(x.size) * x.dtype.itemsize + param_bytes + B * padded_out * 4

    # VMEM budget: double-buffered activation tiles + (conservatively 2x) resident params.
    tile_bytes = TB * f_in * 4 + TB * padded_out * 4
    vmem_limit = max(2 * (param_bytes + tile_bytes) + (4 << 20), 32 << 20)

    kernel = functools.partial(_mlp_kernel, n_hidden)
    out_padded = pl.pallas_call(
        kernel,
        out_shape=jax.ShapeDtypeStruct((B, padded_out), jnp.float32),
        grid=grid,
        in_specs=[x_spec] + param_specs,
        out_specs=out_spec,
        compiler_params=pltpu.CompilerParams(
            dimension_semantics=("parallel",),     # shard batch tiles across TCs (v7x)
            vmem_limit_bytes=int(vmem_limit),
        ),
        cost_estimate=pl.CostEstimate(
            flops=flops, transcendentals=0, bytes_accessed=int(bytes_accessed)
        ),
    )(x, *params)
    return out_padded[:, :output_size]


# ------------------------------------------------------------------------- reference
def reference_forward(x, layers, out_wb, eps=1e-5):
    """Pure-JAX f32 reference with the original (unfolded) eval-mode semantics."""
    h = x.astype(jnp.float32)
    for L in layers:
        z = jnp.maximum(h @ L["w"] + L["b"], 0.0)
        s = L["gamma"] / jnp.sqrt(L["var"] + eps)
        h = z * s + (L["beta"] - L["mean"] * s)
    w_out, b_out = out_wb
    return h @ w_out + b_out


# ------------------------------------------------------------------------------ main
if __name__ == "__main__":
    input_size = 16
    hidden_sizes = [32, 64]
    output_size = 4
    batch = 8

    key = jax.random.PRNGKey(0)
    key, kx = jax.random.split(key)
    x = jax.random.normal(kx, (batch, input_size), jnp.float32)

    layers, out_wb = init_params(key, input_size, hidden_sizes, output_size)
    params, out_pad = fold_params(layers, out_wb)

    out = dust_feedback_forward(x, params, len(hidden_sizes), output_size, out_pad)
    out = jax.block_until_ready(out)

    ref = reference_forward(x, layers, out_wb)
    assert out.shape == (batch, output_size)
    # bf16 matmuls vs. f32 reference -> loosened tolerance (values here are O(0.3)).
    assert jnp.allclose(out, ref, atol=5e-2, rtol=5e-2), "mismatch vs reference"

    print("KERNEL_OK")
</pallas_src>

<mosaic_0001>
module attributes {stable_mosaic.version = 11 : i64} {
  func.func @_mlp_kernel(%arg0: i32, %arg1: memref<8x16xf32, #tpu.memory_space<vmem>>, %arg2: memref<16x32xbf16, #tpu.memory_space<vmem>>, %arg3: memref<1x32xf32, #tpu.memory_space<vmem>>, %arg4: memref<32x64xbf16, #tpu.memory_space<vmem>>, %arg5: memref<1x64xf32, #tpu.memory_space<vmem>>, %arg6: memref<64x128xbf16, #tpu.memory_space<vmem>>, %arg7: memref<1x128xf32, #tpu.memory_space<vmem>>, %arg8: memref<8x128xf32, #tpu.memory_space<vmem>>) attributes {dimension_semantics = [#tpu.dimension_semantics<parallel>], iteration_bounds = array<i64: 1>, scalar_prefetch = 0 : i64, scratch_operands = 0 : i64, tpu.core_type = #tpu.core_type<tc>, window_params = [{transform_indices = @transform_0, window_bounds = array<i64: 8, 16>}, {pipeline_mode = #tpu.pipeline_mode<synchronous>, transform_indices = @transform_1, window_bounds = array<i64: 16, 32>}, {pipeline_mode = #tpu.pipeline_mode<synchronous>, transform_indices = @transform_2, window_bounds = array<i64: 1, 32>}, {pipeline_mode = #tpu.pipeline_mode<synchronous>, transform_indices = @transform_3, window_bounds = array<i64: 32, 64>}, {pipeline_mode = #tpu.pipeline_mode<synchronous>, transform_indices = @transform_4, window_bounds = array<i64: 1, 64>}, {pipeline_mode = #tpu.pipeline_mode<synchronous>, transform_indices = @transform_5, window_bounds = array<i64: 64, 128>}, {pipeline_mode = #tpu.pipeline_mode<synchronous>, transform_indices = @transform_6, window_bounds = array<i64: 1, 128>}, {transform_indices = @transform_7, window_bounds = array<i64: 8, 128>}]} {
    %c0 = arith.constant 0 : index
    %c0_0 = arith.constant 0 : index
    %0 = vector.load %arg1[%c0, %c0_0] : memref<8x16xf32, #tpu.memory_space<vmem>>, vector<8x16xf32>
    %c0_1 = arith.constant 0 : index
    %c0_2 = arith.constant 0 : index
    %1 = vector.load %arg2[%c0_1, %c0_2] : memref<16x32xbf16, #tpu.memory_space<vmem>>, vector<16x32xbf16>
    %c0_3 = arith.constant 0 : index
    %c0_4 = arith.constant 0 : index
    %2 = vector.load %arg3[%c0_3, %c0_4] : memref<1x32xf32, #tpu.memory_space<vmem>>, vector<1x32xf32>
    %3 = arith.truncf %0 : vector<8x16xf32> to vector<8x16xbf16>
    %cst = arith.constant dense<0.000000e+00> : vector<8x32xf32>
    %4 = tpu.matmul %3, %1, %cst {dimension_numbers = #tpu.dot_dimension_numbers<[1], [0], [0], [1], [0, 0, 1, 1], [], []>} : vector<8x16xbf16>, vector<16x32xbf16>, vector<8x32xf32> -> vector<8x32xf32>
    %5 = vector.broadcast %2 : vector<1x32xf32> to vector<8x32xf32>
    %6 = arith.addf %4, %5 : vector<8x32xf32>
    %cst_5 = arith.constant 0.000000e+00 : f32
    %7 = vector.broadcast %cst_5 : f32 to vector<8x32xf32>
    %8 = arith.maximumf %6, %7 : vector<8x32xf32>
    %c0_6 = arith.constant 0 : index
    %c0_7 = arith.constant 0 : index
    %9 = vector.load %arg4[%c0_6, %c0_7] : memref<32x64xbf16, #tpu.memory_space<vmem>>, vector<32x64xbf16>
    %c0_8 = arith.constant 0 : index
    %c0_9 = arith.constant 0 : index
    %10 = vector.load %arg5[%c0_8, %c0_9] : memref<1x64xf32, #tpu.memory_space<vmem>>, vector<1x64xf32>
    %11 = arith.truncf %8 : vector<8x32xf32> to vector<8x32xbf16>
    %cst_10 = arith.constant dense<0.000000e+00> : vector<8x64xf32>
    %12 = tpu.matmul %11, %9, %cst_10 {dimension_numbers = #tpu.dot_dimension_numbers<[1], [0], [0], [1], [0, 0, 1, 1], [], []>} : vector<8x32xbf16>, vector<32x64xbf16>, vector<8x64xf32> -> vector<8x64xf32>
    %13 = vector.broadcast %10 : vector<1x64xf32> to vector<8x64xf32>
    %14 = arith.addf %12, %13 : vector<8x64xf32>
    %cst_11 = arith.constant 0.000000e+00 : f32
    %15 = vector.broadcast %cst_11 : f32 to vector<8x64xf32>
    %16 = arith.maximumf %14, %15 : vector<8x64xf32>
    %c0_12 = arith.constant 0 : index
    %c0_13 = arith.constant 0 : index
    %17 = vector.load %arg6[%c0_12, %c0_13] : memref<64x128xbf16, #tpu.memory_space<vmem>>, vector<64x128xbf16>
    %c0_14 = arith.constant 0 : index
    %c0_15 = arith.constant 0 : index
    %18 = vector.load %arg7[%c0_14, %c0_15] : memref<1x128xf32, #tpu.memory_space<vmem>>, vector<1x128xf32>
    %19 = arith.truncf %16 : vector<8x64xf32> to vector<8x64xbf16>
    %cst_16 = arith.constant dense<0.000000e+00> : vector<8x128xf32>
    %20 = tpu.matmul %19, %17, %cst_16 {dimension_numbers = #tpu.dot_dimension_numbers<[1], [0], [0], [1], [0, 0, 1, 1], [], []>} : vector<8x64xbf16>, vector<64x128xbf16>, vector<8x128xf32> -> vector<8x128xf32>
    %21 = vector.broadcast %18 : vector<1x128xf32> to vector<8x128xf32>
    %22 = arith.addf %20, %21 : vector<8x128xf32>
    %c0_17 = arith.constant 0 : index
    %c0_18 = arith.constant 0 : index
    %23 = vector.load %arg8[%c0_17, %c0_18] : memref<8x128xf32, #tpu.memory_space<vmem>>, vector<8x128xf32>
    tpu.vector_store %arg8[%c0_17, %c0_18], %22 {strides = array<i32>} : memref<8x128xf32, #tpu.memory_space<vmem>>, vector<8x128xf32>,
    return
  }
  func.func @transform_0(%arg0: i32) -> (i32, i32) {
    %c0_i32 = arith.constant 0 : i32
    %c0_i32_0 = arith.constant 0 : i32
    return %arg0, %c0_i32 : i32, i32
  }
  func.func @transform_1(%arg0: i32) -> (i32, i32) {
    %c0_i32 = arith.constant 0 : i32
    %c0_i32_0 = arith.constant 0 : i32
    %c0_i32_1 = arith.constant 0 : i32
    return %c0_i32, %c0_i32_0 : i32, i32
  }
  func.func @transform_2(%arg0: i32) -> (i32, i32) {
    %c0_i32 = arith.constant 0 : i32
    %c0_i32_0 = arith.constant 0 : i32
    %c0_i32_1 = arith.constant 0 : i32
    return %c0_i32, %c0_i32_0 : i32, i32
  }
  func.func @transform_3(%arg0: i32) -> (i32, i32) {
    %c0_i32 = arith.constant 0 : i32
    %c0_i32_0 = arith.constant 0 : i32
    %c0_i32_1 = arith.constant 0 : i32
    return %c0_i32, %c0_i32_0 : i32, i32
  }
  func.func @transform_4(%arg0: i32) -> (i32, i32) {
    %c0_i32 = arith.constant 0 : i32
    %c0_i32_0 = arith.constant 0 : i32
    %c0_i32_1 = arith.constant 0 : i32
    return %c0_i32, %c0_i32_0 : i32, i32
  }
  func.func @transform_5(%arg0: i32) -> (i32, i32) {
    %c0_i32 = arith.constant 0 : i32
    %c0_i32_0 = arith.constant 0 : i32
    %c0_i32_1 = arith.constant 0 : i32
    return %c0_i32, %c0_i32_0 : i32, i32
  }
  func.func @transform_6(%arg0: i32) -> (i32, i32) {
    %c0_i32 = arith.constant 0 : i32
    %c0_i32_0 = arith.constant 0 : i32
    %c0_i32_1 = arith.constant 0 : i32
    return %c0_i32, %c0_i32_0 : i32, i32
  }
  func.func @transform_7(%arg0: i32) -> (i32, i32) {
    %c0_i32 = arith.constant 0 : i32
    %c0_i32_0 = arith.constant 0 : i32
    return %arg0, %c0_i32 : i32, i32
  }
}

</mosaic_0001>

<llo_original>
// kernel: tpu_custom_call.1
$region0: #{tpu_custom_call.1}
  #allocation0 [shape = 'u32[]', space=smem, size = 0x4, offset = 0x4, fixed_abs, tag = 'smem constant byte address 0x4 - core index']
  #allocation1 [shape = 'u32[144,128]{1,0:T(1,128)}', space=vmem, size = 0x12000, scoped, tag = 'internal scratch']
  %s0 = inlined_call_operand.hbm [shape: f32[8,16], index: 0, kind: input, shape index: {}]
  %s1 = inlined_call_operand.hbm [shape: bf16[16,32], index: 1, kind: input, shape index: {}]
  %s2 = inlined_call_operand.vmem [shape: f32[1,32], index: 2, kind: input, shape index: {}]
  %s3 = inlined_call_operand.hbm [shape: bf16[32,64], index: 3, kind: input, shape index: {}]
  %s4 = inlined_call_operand.vmem [shape: f32[1,64], index: 4, kind: input, shape index: {}]
  %s5 = inlined_call_operand.hbm [shape: bf16[64,128], index: 5, kind: input, shape index: {}]
  %s6 = inlined_call_operand.vmem [shape: f32[1,128], index: 6, kind: input, shape index: {}]
  %s7 = inlined_call_operand.hbm [shape: f32[8,128], index: 7, kind: output, shape index: {}]
  %s8 = sld [smem:[#allocation0]]
  $region54: #{tpu_custom_call.1} parent=0
    _
  %s10 = ssub.s32 1, %s8
  %s11 = scalar_select 0, %s10, %s8
  $region1: #{tpu_custom_call.1} parent=0
    #allocation2 [shape = 'u8[4096]{0}', space=vmem, size = 0x1000, scoped, tag = 'input window, operand 0, single buffered']
    #allocation3 [shape = 's32[1]{0}', space=sflag, size = 0x4, scoped, tag = 'scoped memory for tpu_custom_call.1']
    #allocation4 [shape = 's32[1]{0}', space=sflag, size = 0x4, scoped, tag = 'scoped memory for tpu_custom_call.1']
    #allocation5 [shape = 'u8[4096]{0}', space=vmem, size = 0x1000, scoped, tag = 'input window, operand 1, single buffered']
    #allocation6 [shape = 's32[1]{0}', space=sflag, size = 0x4, scoped, tag = 'scoped memory for tpu_custom_call.1']
    #allocation7 [shape = 'u8[8192]{0}', space=vmem, size = 0x2000, scoped, tag = 'input window, operand 3, single buffered']
    #allocation8 [shape = 'u8[16384]{0}', space=vmem, size = 0x4000, scoped, tag = 'input window, operand 5, single buffered']
    #allocation9 [shape = 's32[1]{0}', space=sflag, size = 0x4, scoped, tag = 'scoped memory for tpu_custom_call.1']
    #allocation10 [shape = 'u8[4096]{0}', space=vmem, size = 0x1000, scoped, tag = 'output window, operand 0, single buffered']
    %12 = vsyncpa [#allocation3], 0
    %13 = vsyncpa [#allocation6], 0
    %14 = vsyncpa [#allocation9], 0
    %15 = vsyncpa [#allocation4], 0
    // Predicated region
    $region2: #{tpu_custom_call.1} parent=1 // pred_check
      _
    $region3: #{tpu_custom_call.1} parent=1 // pred_check_branch
      %17 = sbr.rel (0) target = $region5
    $region4: #{tpu_custom_call.1} parent=1 // pred_region
      %s19 = ssub.s32 128, 128
      %20 = vsyncadd [#allocation3], %s19
      %s22 = sshll.u32 [#allocation2], 4
      %s23 = int_to_ptr.vmem [resolvable:$true] %s22
      %25 = dma.hbm_to_vmem [thread:$0]  %s0, 128, %s23, [#allocation3]
    $region5: #{tpu_custom_call.1} parent=1 // pred_fallthru
      _
    // Predicated region
    $region6: #{tpu_custom_call.1} parent=1 // pred_check
      _
    $region7: #{tpu_custom_call.1} parent=1 // pred_check_branch
      %27 = sbr.rel (0) target = $region9
    $region8: #{tpu_custom_call.1} parent=1 // pred_region
      %s29 = ssub.s32 128, 128
      %30 = vsyncadd [#allocation6], %s29
      %s31 = sshll.u32 [#allocation5], 4
      %s32 = int_to_ptr.vmem [resolvable:$true] %s31
      %37 = dma.hbm_to_vmem [thread:$0]  %s1, 128, %s32, [#allocation6], 64, 64, 4
    $region9: #{tpu_custom_call.1} parent=1 // pred_fallthru
      _
    // Predicated region
    $region10: #{tpu_custom_call.1} parent=1 // pred_check
      _
    $region11: #{tpu_custom_call.1} parent=1 // pred_check_branch
      %39 = sbr.rel (0) target = $region13
    $region12: #{tpu_custom_call.1} parent=1 // pred_region
      _
    $region13: #{tpu_custom_call.1} parent=1 // pred_fallthru
      _
    // Predicated region
    $region14: #{tpu_custom_call.1} parent=1 // pred_check
      _
    $region15: #{tpu_custom_call.1} parent=1 // pred_check_branch
      %41 = sbr.rel (0) target = $region17
    $region16: #{tpu_custom_call.1} parent=1 // pred_region
      %s43 = ssub.s32 256, 256
      %44 = vsyncadd [#allocation6], %s43
      %s45 = sshll.u32 [#allocation7], 4
      %s46 = int_to_ptr.vmem [resolvable:$true] %s45
      %51 = dma.hbm_to_vmem [thread:$0]  %s3, 256, %s46, [#allocation6], 64, 64, 4
    $region17: #{tpu_custom_call.1} parent=1 // pred_fallthru
      _
    // Predicated region
    $region18: #{tpu_custom_call.1} parent=1 // pred_check
      _
    $region19: #{tpu_custom_call.1} parent=1 // pred_check_branch
      %53 = sbr.rel (0) target = $region21
    $region20: #{tpu_custom_call.1} parent=1 // pred_region
      _
    $region21: #{tpu_custom_call.1} parent=1 // pred_fallthru
      _
    // Predicated region
    $region22: #{tpu_custom_call.1} parent=1 // pred_check
      _
    $region23: #{tpu_custom_call.1} parent=1 // pred_check_branch
      %55 = sbr.rel (0) target = $region25
    $region24: #{tpu_custom_call.1} parent=1 // pred_region
      %s57 = ssub.s32 512, 512
      %58 = vsyncadd [#allocation9], %s57
      %s59 = sshll.u32 [#allocation8], 4
      %s60 = int_to_ptr.vmem [resolvable:$true] %s59
      %65 = dma.hbm_to_vmem [thread:$0]  %s5, 512, %s60, [#allocation9], 64, 64, 4
    $region25: #{tpu_custom_call.1} parent=1 // pred_fallthru
      _
    // Predicated region
    $region26: #{tpu_custom_call.1} parent=1 // pred_check
      _
    $region27: #{tpu_custom_call.1} parent=1 // pred_check_branch
      %67 = sbr.rel (0) target = $region29
    $region28: #{tpu_custom_call.1} parent=1 // pred_region
      _
    $region29: #{tpu_custom_call.1} parent=1 // pred_fallthru
      _
    // Predicated region
    $region30: #{tpu_custom_call.1} parent=1 // pred_check
      _
    $region31: #{tpu_custom_call.1} parent=1 // pred_check_branch
      %69 = sbr.rel (0) target = $region33
    $region32: #{tpu_custom_call.1} parent=1 // pred_region
      %70 = dma.done [#allocation3], 128
    $region33: #{tpu_custom_call.1} parent=1 // pred_fallthru
      _
    // Predicated region
    $region34: #{tpu_custom_call.1} parent=1 // pred_check
      _
    $region35: #{tpu_custom_call.1} parent=1 // pred_check_branch
      %72 = sbr.rel (0) target = $region37
    $region36: #{tpu_custom_call.1} parent=1 // pred_region
      %73 = dma.done [#allocation6], 128
    $region37: #{tpu_custom_call.1} parent=1 // pred_fallthru
      _
    // Predicated region
    $region38: #{tpu_custom_call.1} parent=1 // pred_check
      _
    $region39: #{tpu_custom_call.1} parent=1 // pred_check_branch
      %75 = sbr.rel (0) target = $region41
    $region40: #{tpu_custom_call.1} parent=1 // pred_region
      %76 = dma.done [#allocation6], 256
    $region41: #{tpu_custom_call.1} parent=1 // pred_fallthru
      _
    // Predicated region
    $region42: #{tpu_custom_call.1} parent=1 // pred_check
      _
    $region43: #{tpu_custom_call.1} parent=1 // pred_check_branch
      %78 = sbr.rel (0) target = $region45
    $region44: #{tpu_custom_call.1} parent=1 // pred_region
      %79 = dma.done [#allocation9], 512
    $region45: #{tpu_custom_call.1} parent=1 // pred_fallthru
      _
    %v81 = vld [vmem:[#allocation2] sm:$0xff]
    %v82 = vld [vmem:[#allocation5] sm:$0xf]
    %v83 = vld [vmem:[#allocation5 + $0x4] sm:$0xf]
    %v84 = vld [vmem:[%s2] sm:$0x1]
    %v85 = vpack.c.bf16 %v81, %v81
    %v87 = vlaneseq
    %v88 = vshrl.u32 %v87, 7
    %v89 = vsub.s32 0, %v88
    %v90 = vrot.slane %v84, %v89
    %v94 = vunpack.c.l.b16 %v82
    %v95 = vunpack.c.l.b16 %v83
    %v96 = vpack.c.b16 %v95, %v94
    %vm98 = vcmask 130048
    %v100 = vsel %vm98, %v85, 0
    %102 = vmatprep.subr.bf16.mxu0 0
    %103 = vmatpush1.bf16.msra.mxu0 0
    %104 = vmatprep.subr.bf16.mxu0 0
    %105 = vmatpush1.bf16.msra.mxu0 0
    %106 = vmatprep.subr.bf16.mxu0 0
    %107 = vmatpush1.bf16.msra.mxu0 0
    %108 = vmatprep.subr.bf16.mxu0 0
    %109 = vmatpush1.bf16.msra.mxu0 0
    %110 = vmatprep.subr.bf16.mxu0 0
    %111 = vmatpush1.bf16.msra.mxu0 0
    %112 = vmatprep.subr.bf16.mxu0 0
    %113 = vmatpush1.bf16.msra.mxu0 0
    %114 = vmatprep.subr.bf16.mxu0 0
    %115 = vmatpush1.bf16.msra.mxu0 0
    %116 = vmatprep.subr.bf16.mxu0 0
    %117 = vmatpush1.bf16.msra.mxu0 %v96
    %118 = vmatprep.subr.bf16.mxu0 0
    %119 = vmatpush2.bf16.msra.mxu0 0
    %120 = vmatprep.subr.bf16.mxu0 0
    %121 = vmatpush2.bf16.msra.mxu0 0
    %122 = vmatprep.subr.bf16.mxu0 0
    %123 = vmatpush2.bf16.msra.mxu0 0
    %124 = vmatprep.subr.bf16.mxu0 0
    %125 = vmatpush2.bf16.msra.mxu0 0
    %126 = vmatprep.subr.bf16.mxu0 0
    %127 = vmatpush2.bf16.msra.mxu0 0
    %128 = vmatprep.subr.bf16.mxu0 0
    %129 = vmatpush2.bf16.msra.mxu0 0
    %130 = vmatprep.subr.bf16.mxu0 0
    %131 = vmatpush2.bf16.msra.mxu0 0
    %132 = vmatprep.subr.bf16.mxu0 0
    %133 = vmatpush2.bf16.msra.mxu0 0
    %134 = vmatprep.mubr.bf16.mxu0 0
    %135 = vmatmul.mubr.bf16.gmra.mxu0 %v100
    %v136 = vpop.f32.mrf.mxu0
    %v137 = vadd.f32 %v90, %v136
    %v138 = vpop.f32.mrf.mxu0
    %v139 = vpop.f32.mrf.mxu0
    %v140 = vpop.f32.mrf.mxu0
    %141 = vdwg.mxu0
    %v142 = vmax.f32 %v137, 0.0
    %v143 = vld [vmem:[#allocation7] sm:$0xf]
    %v144 = vld [vmem:[#allocation7 + $0x4] sm:$0xf]
    %v145 = vld [vmem:[#allocation7 + $0x8] sm:$0xf]
    %v146 = vld [vmem:[#allocation7 + $0xc] sm:$0xf]
    %v147 = vld [vmem:[%s4] sm:$0x1]
    %v148 = vpack.c.bf16 %v142, %v142
    %v150 = vlaneseq
    %v151 = vshrl.u32 %v150, 7
    %v152 = vsub.s32 0, %v151
    %v153 = vrot.slane %v147, %v152
    %v159 = vunpack.c.l.b16 %v143
    %v160 = vunpack.c.l.b16 %v144
    %v161 = vunpack.c.l.b16 %v145
    %v162 = vunpack.c.l.b16 %v146
    %v163 = vpack.c.b16 %v160, %v159
    %v164 = vpack.c.b16 %v162, %v161
    %vm167 = vcmask 261120
    %v169 = vsel %vm167, %v148, 0
    %171 = vmatprep.subr.bf16.mxu0 0
    %172 = vmatpush1.bf16.msra.mxu0 0
    %173 = vmatprep.subr.bf16.mxu0 0
    %174 = vmatpush1.bf16.msra.mxu0 0
    %175 = vmatprep.subr.bf16.mxu0 0
    %176 = vmatpush1.bf16.msra.mxu0 0
    %177 = vmatprep.subr.bf16.mxu0 0
    %178 = vmatpush1.bf16.msra.mxu0 0
    %179 = vmatprep.subr.bf16.mxu0 0
    %180 = vmatpush1.bf16.msra.mxu0 0
    %181 = vmatprep.subr.bf16.mxu0 0
    %182 = vmatpush1.bf16.msra.mxu0 0
    %183 = vmatprep.subr.bf16.mxu0 0
    %184 = vmatpush1.bf16.msra.mxu0 %v164
    %185 = vmatprep.subr.bf16.mxu0 0
    %186 = vmatpush1.bf16.msra.mxu0 %v163
    %187 = vmatprep.subr.bf16.mxu0 0
    %188 = vmatpush2.bf16.msra.mxu0 0
    %189 = vmatprep.subr.bf16.mxu0 0
    %190 = vmatpush2.bf16.msra.mxu0 0
    %191 = vmatprep.subr.bf16.mxu0 0
    %192 = vmatpush2.bf16.msra.mxu0 0
    %193 = vmatprep.subr.bf16.mxu0 0
    %194 = vmatpush2.bf16.msra.mxu0 0
    %195 = vmatprep.subr.bf16.mxu0 0
    %196 = vmatpush2.bf16.msra.mxu0 0
    %197 = vmatprep.subr.bf16.mxu0 0
    %198 = vmatpush2.bf16.msra.mxu0 0
    %199 = vmatprep.subr.bf16.mxu0 0
    %200 = vmatpush2.bf16.msra.mxu0 0
    %201 = vmatprep.subr.bf16.mxu0 0
    %202 = vmatpush2.bf16.msra.mxu0 0
    %203 = vmatprep.mubr.bf16.mxu0 0
    %204 = vmatmul.mubr.bf16.gmra.mxu0 %v169
    %v205 = vpop.f32.mrf.mxu0
    %v206 = vadd.f32 %v153, %v205
    %v207 = vpop.f32.mrf.mxu0
    %v208 = vpop.f32.mrf.mxu0
    %v209 = vpop.f32.mrf.mxu0
    %210 = vdwg.mxu0
    %v211 = vmax.f32 %v206, 0.0
    %v212 = vld [vmem:[#allocation8] sm:$0xf]
    %v213 = vld [vmem:[#allocation8 + $0x4] sm:$0xf]
    %v214 = vld [vmem:[#allocation8 + $0x8] sm:$0xf]
    %v215 = vld [vmem:[#allocation8 + $0xc] sm:$0xf]
    %v216 = vld [vmem:[#allocation8 + $0x10] sm:$0xf]
    %v217 = vld [vmem:[#allocation8 + $0x14] sm:$0xf]
    %v218 = vld [vmem:[#allocation8 + $0x18] sm:$0xf]
    %v219 = vld [vmem:[#allocation8 + $0x1c] sm:$0xf]
    %v220 = vld [vmem:[%s6] sm:$0x1]
    %v221 = vpack.c.bf16 %v211, %v211
    %v223 = vlaneseq
    %v224 = vshrl.u32 %v223, 7
    %v225 = vsub.s32 0, %v224
    %v226 = vrot.slane %v220, %v225
    %v236 = vunpack.c.l.b16 %v212
    %v237 = vunpack.c.l.b16 %v213
    %v238 = vunpack.c.l.b16 %v214
    %v239 = vunpack.c.l.b16 %v215
    %v240 = vunpack.c.l.b16 %v216
    %v241 = vunpack.c.l.b16 %v217
    %v242 = vunpack.c.l.b16 %v218
    %v243 = vunpack.c.l.b16 %v219
    %v244 = vpack.c.b16 %v237, %v236
    %v245 = vpack.c.b16 %v239, %v238
    %v246 = vpack.c.b16 %v241, %v240
    %v247 = vpack.c.b16 %v243, %v242
    %vm252 = vcmask 523264
    %v254 = vsel %vm252, %v221, 0
    %256 = vmatprep.subr.bf16.mxu0 0
    %257 = vmatpush1.bf16.msra.mxu0 0
    %258 = vmatprep.subr.bf16.mxu0 0
    %259 = vmatpush1.bf16.msra.mxu0 0
    %260 = vmatprep.subr.bf16.mxu0 0
    %261 = vmatpush1.bf16.msra.mxu0 0
    %262 = vmatprep.subr.bf16.mxu0 0
    %263 = vmatpush1.bf16.msra.mxu0 0
    %264 = vmatprep.subr.bf16.mxu0 0
    %265 = vmatpush1.bf16.msra.mxu0 %v247
    %266 = vmatprep.subr.bf16.mxu0 0
    %267 = vmatpush1.bf16.msra.mxu0 %v246
    %268 = vmatprep.subr.bf16.mxu0 0
    %269 = vmatpush1.bf16.msra.mxu0 %v245
    %270 = vmatprep.subr.bf16.mxu0 0
    %271 = vmatpush1.bf16.msra.mxu0 %v244
    %272 = vmatprep.subr.bf16.mxu0 0
    %273 = vmatpush2.bf16.msra.mxu0 0
    %274 = vmatprep.subr.bf16.mxu0 0
    %275 = vmatpush2.bf16.msra.mxu0 0
    %276 = vmatprep.subr.bf16.mxu0 0
    %277 = vmatpush2.bf16.msra.mxu0 0
    %278 = vmatprep.subr.bf16.mxu0 0
    %279 = vmatpush2.bf16.msra.mxu0 0
    %280 = vmatprep.subr.bf16.mxu0 0
    %281 = vmatpush2.bf16.msra.mxu0 0
    %282 = vmatprep.subr.bf16.mxu0 0
    %283 = vmatpush2.bf16.msra.mxu0 0
    %284 = vmatprep.subr.bf16.mxu0 0
    %285 = vmatpush2.bf16.msra.mxu0 0
    %286 = vmatprep.subr.bf16.mxu0 0
    %287 = vmatpush2.bf16.msra.mxu0 0
    %288 = vmatprep.mubr.bf16.mxu0 0
    %289 = vmatmul.mubr.bf16.gmra.mxu0 %v254
    %v290 = vpop.f32.mrf.mxu0
    %v291 = vadd.f32 %v226, %v290
    %v292 = vpop.f32.mrf.mxu0
    %v293 = vpop.f32.mrf.mxu0
    %v294 = vpop.f32.mrf.mxu0
    %295 = vdwg.mxu0
    %296 = vst [vmem:[#allocation10] sm:$0xff] %v291
    // Predicated region
    $region46: #{tpu_custom_call.1} parent=1 // pred_check
      _
    $region47: #{tpu_custom_call.1} parent=1 // pred_check_branch
      %298 = sbr.rel (0) target = $region49
    $region48: #{tpu_custom_call.1} parent=1 // pred_region
      %s300 = ssub.s32 128, 128
      %301 = vsyncadd [#allocation4], %s300
      %s303 = sshll.u32 [#allocation10], 4
      %s304 = int_to_ptr.vmem [resolvable:$true] %s303
      %306 = dma.vmem_to_hbm [thread:$0]  %s304, 128, %s7, [#allocation4]
    $region49: #{tpu_custom_call.1} parent=1 // pred_fallthru
      _
    // Predicated region
    $region50: #{tpu_custom_call.1} parent=1 // pred_check
      _
    $region51: #{tpu_custom_call.1} parent=1 // pred_check_branch
      %308 = sbr.rel (0) target = $region53
    $region52: #{tpu_custom_call.1} parent=1 // pred_region
      %309 = dma.done [#allocation4], 128
    $region53: #{tpu_custom_call.1} parent=1 // pred_fallthru
      _
    %310 = vsyncpa [#allocation3], 1
    %311 = vsyncpa [#allocation6], 1
    %312 = vsyncpa [#allocation9], 1
    %313 = vsyncpa [#allocation4], 1

</llo_original>
